<compile_context>
chip_gen: v6e
topology: v6e:2x2x1
jax: 0.10.0
libtpu: 0.0.40
codegen_flags: <defaults>
</compile_context>

<pallas_src>
import jax
import jax.numpy as jnp
from jax.experimental import pallas as pl
from jax.experimental.pallas import tpu as pltpu


def critic_kernel(x_ref, w1_ref, b1_ref, w2_ref, b2_ref, w3_ref, b3_ref, o_ref):
    # In-kernel cast of the activations to the matmul dtype (bf16 by default):
    # a VPU pack hidden under the matmuls instead of an extra HBM pass in XLA.
    x = x_ref[...].astype(w1_ref.dtype)                                 # [TILE_B, 128]
    h1 = jnp.dot(x, w1_ref[...], preferred_element_type=jnp.float32) + b1_ref[...]
    h1 = jnp.maximum(h1, 0.0).astype(w2_ref.dtype)                      # relu(fc1)
    h2 = jnp.dot(h1, w2_ref[...], preferred_element_type=jnp.float32) + b2_ref[...]
    h2 = jnp.maximum(h2, 0.0)                                           # relu(fc2), f32
    # fc3 (out_features = 1): VPU multiply + lane reduction instead of an N=1 MXU matmul.
    v = jnp.sum(h2 * w3_ref[...], axis=-1, keepdims=True) + b3_ref[0]
    o_ref[...] = v.astype(o_ref.dtype)                                  # [TILE_B, 1]


def _round_up(n, m):
    return ((n + m - 1) // m) * m


def critic_forward(mem, params, *, tile_b=None):
    """mem: [B, 128] float32; returns [B, 1] float32 (matches PyTorch fc3 output)."""
    w1, b1, w2, b2, w3_row, b3 = params
    B, F = mem.shape
    assert F == 128

    if tile_b is None:
        # Small-B RL step: a single tile with at most 7 padded (OOB) rows.
        # Large B: 2048-row tiles to amortize per-grid-step pipeline overhead
        # (sweep 1024/2048/4096 if this becomes the hot op).
        tile_b = _round_up(B, 8) if B <= 1024 else 2048
    tile_b = max(8, _round_up(tile_b, 8))
    num_tiles = pl.cdiv(B, tile_b)

    param_bytes = sum(int(p.size) * p.dtype.itemsize for p in params)
    cost = pl.CostEstimate(
        flops=2 * B * (128 * 256 + 256 * 256 + 256),
        transcendentals=0,
        bytes_accessed=B * 128 * mem.dtype.itemsize + param_bytes + B * 4,
    )

    out = pl.pallas_call(
        critic_kernel,
        out_shape=jax.ShapeDtypeStruct((B, 1), jnp.float32),
        grid=(num_tiles,),
        in_specs=[
            pl.BlockSpec((tile_b, 128), lambda i: (i, 0)),   # x tile (pipelined)
            pl.BlockSpec((128, 256), lambda i: (0, 0)),      # w1  (VMEM-resident)
            pl.BlockSpec((1, 256), lambda i: (0, 0)),        # b1
            pl.BlockSpec((256, 256), lambda i: (0, 0)),      # w2
            pl.BlockSpec((1, 256), lambda i: (0, 0)),        # b2
            pl.BlockSpec((1, 256), lambda i: (0, 0)),        # fc3 weight as a row
            pl.BlockSpec(memory_space=pltpu.SMEM),           # b3 scalar in SMEM
        ],
        out_specs=pl.BlockSpec((tile_b, 1), lambda i: (i, 0)),
        compiler_params=pltpu.CompilerParams(
            dimension_semantics=("parallel",),   # batch axis independent (megacore)
            vmem_limit_bytes=32 << 20,           # headroom for large f32 tiles on v5e
        ),
        cost_estimate=cost,
    )(mem, w1, b1, w2, b2, w3_row, b3)
    return out


def init_params(key, *, matmul_dtype=jnp.bfloat16):
    """Deterministic init mimicking nn.Linear's uniform(-1/sqrt(fan_in), 1/sqrt(fan_in)).

    Weights are stored [in_features, out_features] (transposed vs. PyTorch).  fc1/fc2
    weights are stored once in `matmul_dtype` (bf16 by default -> MXU peak on
    v5e/v6e/v7x; pass jnp.float32 for a bit-faithful f32 path).  Biases, fc3's (1,256)
    row and its (1,) bias stay f32 (the accumulate / VPU path is f32 either way).
    """
    def linear(k, fan_in, fan_out):
        kw, kb = jax.random.split(k)
        bound = 1.0 / jnp.sqrt(fan_in)
        w = jax.random.uniform(kw, (fan_in, fan_out), jnp.float32, -bound, bound)
        b = jax.random.uniform(kb, (1, fan_out), jnp.float32, -bound, bound)
        return w, b

    k1, k2, k3 = jax.random.split(key, 3)
    w1, b1 = linear(k1, 128, 256)
    w2, b2 = linear(k2, 256, 256)
    w3, b3 = linear(k3, 256, 1)
    return (w1.astype(matmul_dtype), b1, w2.astype(matmul_dtype), b2,
            w3.reshape(1, 256), b3.reshape(1))


def _reference(mem, params):
    w1, b1, w2, b2, w3_row, b3 = params
    h = jnp.maximum(mem @ w1.astype(jnp.float32) + b1, 0.0)
    h = jnp.maximum(h @ w2.astype(jnp.float32) + b2, 0.0)
    return jnp.sum(h * w3_row, axis=-1, keepdims=True) + b3


if __name__ == "__main__":
    key = jax.random.PRNGKey(0)
    k_params, k_x1, k_x2 = jax.random.split(key, 3)

    # Default bf16-matmul path -- small RL-step batch, single 8-row tile (no padding pass).
    params = init_params(k_params)
    B = 8
    mem = jax.random.normal(k_x1, (B, 128), dtype=jnp.float32)
    v = jax.block_until_ready(critic_forward(mem, params))
    ref = _reference(mem, params)
    assert v.shape == (B, 1)
    assert jnp.allclose(v, ref, atol=5e-2, rtol=5e-2), float(jnp.max(jnp.abs(v - ref)))

    # Ragged multi-tile grid: B=300 with tile_b=128 -> 3 grid steps, last tile has
    # 44 valid rows (OOB reads are row-local garbage, OOB writes are dropped).
    B2 = 300
    mem2 = jax.random.normal(k_x2, (B2, 128), dtype=jnp.float32)
    v2 = jax.block_until_ready(critic_forward(mem2, params, tile_b=128))
    ref2 = _reference(mem2, params)
    assert v2.shape == (B2, 1)
    assert jnp.allclose(v2, ref2, atol=5e-2, rtol=5e-2), float(jnp.max(jnp.abs(v2 - ref2)))

    # f32 weight path: numerically faithful to the PyTorch module (tight tolerance).
    params_f32 = init_params(k_params, matmul_dtype=jnp.float32)
    v3 = jax.block_until_ready(critic_forward(mem2, params_f32, tile_b=64))
    ref3 = _reference(mem2, params_f32)
    assert v3.shape == (B2, 1)
    assert jnp.allclose(v3, ref3, atol=1e-3, rtol=1e-3), float(jnp.max(jnp.abs(v3 - ref3)))

    print("KERNEL_OK")
</pallas_src>

<mosaic_0001>
module attributes {stable_mosaic.version = 11 : i64} {
  func.func @critic_kernel(%arg0: i32, %arg1: memref<8x128xf32, #tpu.memory_space<vmem>>, %arg2: memref<128x256xbf16, #tpu.memory_space<vmem>>, %arg3: memref<1x256xf32, #tpu.memory_space<vmem>>, %arg4: memref<256x256xbf16, #tpu.memory_space<vmem>>, %arg5: memref<1x256xf32, #tpu.memory_space<vmem>>, %arg6: memref<1x256xf32, #tpu.memory_space<vmem>>, %arg7: memref<1xf32, #tpu.memory_space<smem>>, %arg8: memref<8x1xf32, #tpu.memory_space<vmem>>) attributes {dimension_semantics = [#tpu.dimension_semantics<parallel>], iteration_bounds = array<i64: 1>, scalar_prefetch = 0 : i64, scratch_operands = 0 : i64, tpu.core_type = #tpu.core_type<tc>, window_params = [{transform_indices = @transform_0, window_bounds = array<i64: 8, 128>}, {pipeline_mode = #tpu.pipeline_mode<synchronous>, transform_indices = @transform_1, window_bounds = array<i64: 128, 256>}, {pipeline_mode = #tpu.pipeline_mode<synchronous>, transform_indices = @transform_2, window_bounds = array<i64: 1, 256>}, {pipeline_mode = #tpu.pipeline_mode<synchronous>, transform_indices = @transform_3, window_bounds = array<i64: 256, 256>}, {pipeline_mode = #tpu.pipeline_mode<synchronous>, transform_indices = @transform_4, window_bounds = array<i64: 1, 256>}, {pipeline_mode = #tpu.pipeline_mode<synchronous>, transform_indices = @transform_5, window_bounds = array<i64: 1, 256>}, {transform_indices = @transform_6, window_bounds = array<i64: 1>}, {transform_indices = @transform_7, window_bounds = array<i64: 8, 1>}]} {
    %c0 = arith.constant 0 : index
    %c0_0 = arith.constant 0 : index
    %0 = vector.load %arg1[%c0, %c0_0] : memref<8x128xf32, #tpu.memory_space<vmem>>, vector<8x128xf32>
    %1 = arith.truncf %0 : vector<8x128xf32> to vector<8x128xbf16>
    %c0_1 = arith.constant 0 : index
    %c0_2 = arith.constant 0 : index
    %2 = vector.load %arg2[%c0_1, %c0_2] : memref<128x256xbf16, #tpu.memory_space<vmem>>, vector<128x256xbf16>
    %cst = arith.constant dense<0.000000e+00> : vector<8x256xf32>
    %3 = tpu.matmul %1, %2, %cst {dimension_numbers = #tpu.dot_dimension_numbers<[1], [0], [0], [1], [0, 0, 1, 1], [], []>} : vector<8x128xbf16>, vector<128x256xbf16>, vector<8x256xf32> -> vector<8x256xf32>
    %c0_3 = arith.constant 0 : index
    %c0_4 = arith.constant 0 : index
    %4 = vector.load %arg3[%c0_3, %c0_4] : memref<1x256xf32, #tpu.memory_space<vmem>>, vector<1x256xf32>
    %5 = vector.broadcast %4 : vector<1x256xf32> to vector<8x256xf32>
    %6 = arith.addf %3, %5 : vector<8x256xf32>
    %cst_5 = arith.constant 0.000000e+00 : f32
    %7 = vector.broadcast %cst_5 : f32 to vector<8x256xf32>
    %8 = arith.maximumf %6, %7 : vector<8x256xf32>
    %9 = arith.truncf %8 : vector<8x256xf32> to vector<8x256xbf16>
    %c0_6 = arith.constant 0 : index
    %c0_7 = arith.constant 0 : index
    %10 = vector.load %arg4[%c0_6, %c0_7] : memref<256x256xbf16, #tpu.memory_space<vmem>>, vector<256x256xbf16>
    %cst_8 = arith.constant dense<0.000000e+00> : vector<8x256xf32>
    %11 = tpu.matmul %9, %10, %cst_8 {dimension_numbers = #tpu.dot_dimension_numbers<[1], [0], [0], [1], [0, 0, 1, 1], [], []>} : vector<8x256xbf16>, vector<256x256xbf16>, vector<8x256xf32> -> vector<8x256xf32>
    %c0_9 = arith.constant 0 : index
    %c0_10 = arith.constant 0 : index
    %12 = vector.load %arg5[%c0_9, %c0_10] : memref<1x256xf32, #tpu.memory_space<vmem>>, vector<1x256xf32>
    %13 = vector.broadcast %12 : vector<1x256xf32> to vector<8x256xf32>
    %14 = arith.addf %11, %13 : vector<8x256xf32>
    %cst_11 = arith.constant 0.000000e+00 : f32
    %15 = vector.broadcast %cst_11 : f32 to vector<8x256xf32>
    %16 = arith.maximumf %14, %15 : vector<8x256xf32>
    %c0_12 = arith.constant 0 : index
    %c0_13 = arith.constant 0 : index
    %17 = vector.load %arg6[%c0_12, %c0_13] : memref<1x256xf32, #tpu.memory_space<vmem>>, vector<1x256xf32>
    %18 = vector.broadcast %17 : vector<1x256xf32> to vector<8x256xf32>
    %19 = arith.mulf %16, %18 : vector<8x256xf32>
    %cst_14 = arith.constant dense<0.000000e+00> : vector<8xf32>
    %20 = vector.multi_reduction <add>, %19, %cst_14 [1] : vector<8x256xf32> to vector<8xf32>
    %21 = vector.shape_cast %20 : vector<8xf32> to vector<8x1xf32>
    %c0_15 = arith.constant 0 : index
    %22 = memref.load %arg7[%c0_15] : memref<1xf32, #tpu.memory_space<smem>>
    %23 = vector.broadcast %22 : f32 to vector<8x1xf32>
    %24 = arith.addf %21, %23 : vector<8x1xf32>
    %c0_16 = arith.constant 0 : index
    %c0_17 = arith.constant 0 : index
    %25 = vector.load %arg8[%c0_16, %c0_17] : memref<8x1xf32, #tpu.memory_space<vmem>>, vector<8x1xf32>
    tpu.vector_store %arg8[%c0_16, %c0_17], %24 {strides = array<i32>} : memref<8x1xf32, #tpu.memory_space<vmem>>, vector<8x1xf32>,
    return
  }
  func.func @transform_0(%arg0: i32) -> (i32, i32) {
    %c0_i32 = arith.constant 0 : i32
    %c0_i32_0 = arith.constant 0 : i32
    return %arg0, %c0_i32 : i32, i32
  }
  func.func @transform_1(%arg0: i32) -> (i32, i32) {
    %c0_i32 = arith.constant 0 : i32
    %c0_i32_0 = arith.constant 0 : i32
    %c0_i32_1 = arith.constant 0 : i32
    return %c0_i32, %c0_i32_0 : i32, i32
  }
  func.func @transform_2(%arg0: i32) -> (i32, i32) {
    %c0_i32 = arith.constant 0 : i32
    %c0_i32_0 = arith.constant 0 : i32
    %c0_i32_1 = arith.constant 0 : i32
    return %c0_i32, %c0_i32_0 : i32, i32
  }
  func.func @transform_3(%arg0: i32) -> (i32, i32) {
    %c0_i32 = arith.constant 0 : i32
    %c0_i32_0 = arith.constant 0 : i32
    %c0_i32_1 = arith.constant 0 : i32
    return %c0_i32, %c0_i32_0 : i32, i32
  }
  func.func @transform_4(%arg0: i32) -> (i32, i32) {
    %c0_i32 = arith.constant 0 : i32
    %c0_i32_0 = arith.constant 0 : i32
    %c0_i32_1 = arith.constant 0 : i32
    return %c0_i32, %c0_i32_0 : i32, i32
  }
  func.func @transform_5(%arg0: i32) -> (i32, i32) {
    %c0_i32 = arith.constant 0 : i32
    %c0_i32_0 = arith.constant 0 : i32
    %c0_i32_1 = arith.constant 0 : i32
    return %c0_i32, %c0_i32_0 : i32, i32
  }
  func.func @transform_6(%arg0: i32) -> i32 {
    %c0_i32 = arith.constant 0 : i32
    %c0_i32_0 = arith.constant 0 : i32
    return %c0_i32 : i32
  }
  func.func @transform_7(%arg0: i32) -> (i32, i32) {
    %c0_i32 = arith.constant 0 : i32
    %c0_i32_0 = arith.constant 0 : i32
    return %arg0, %c0_i32 : i32, i32
  }
}

</mosaic_0001>

<llo_original>
// kernel: tpu_custom_call.1
$region0: #{tpu_custom_call.1}
  #allocation0 [shape = 'u32[]', space=smem, size = 0x4, offset = 0x4, fixed_abs, tag = 'smem constant byte address 0x4 - core index']
  #allocation1 [shape = 'u32[144,128]{1,0:T(1,128)}', space=vmem, size = 0x12000, scoped, tag = 'internal scratch']
  #allocation2 [shape = 'f32[1]{0:T(128)S(6)}', space=smem, size = 0x200, scoped, tag = 'scoped memory for tpu_custom_call.1']
  %s0 = inlined_call_operand.hbm [shape: f32[8,128], index: 0, kind: input, shape index: {}]
  %s1 = inlined_call_operand.hbm [shape: bf16[128,256], index: 1, kind: input, shape index: {}]
  %s2 = inlined_call_operand.vmem [shape: f32[1,256], index: 2, kind: input, shape index: {}]
  %s3 = inlined_call_operand.hbm [shape: bf16[256,256], index: 3, kind: input, shape index: {}]
  %s4 = inlined_call_operand.vmem [shape: f32[1,256], index: 4, kind: input, shape index: {}]
  %s5 = inlined_call_operand.vmem [shape: f32[1,256], index: 5, kind: input, shape index: {}]
  %s6 = inlined_call_operand.<no memory space> [shape: f32[1], index: 6, kind: input, shape index: {}]
  %s7 = inlined_call_operand.vmem [shape: f32[8,1], index: 7, kind: output, shape index: {}]
  %s8 = sld [smem:[#allocation0]]
  $region50: #{tpu_custom_call.1} parent=0
    _
  %s10 = ssub.s32 1, %s8
  %s11 = scalar_select 0, %s10, %s8
  %12 = sst [smem:[#allocation2]] %s6
  $region1: #{tpu_custom_call.1} parent=0
    #allocation3 [shape = 'u8[4096]{0}', space=vmem, size = 0x1000, scoped, tag = 'input window, operand 0, single buffered']
    #allocation4 [shape = 's32[1]{0}', space=sflag, size = 0x4, scoped, tag = 'scoped memory for tpu_custom_call.1']
    #allocation5 [shape = 'u8[65536]{0}', space=vmem, size = 0x10000, scoped, tag = 'input window, operand 1, single buffered']
    #allocation6 [shape = 's32[1]{0}', space=sflag, size = 0x4, scoped, tag = 'scoped memory for tpu_custom_call.1']
    #allocation7 [shape = 'u8[131072]{0}', space=vmem, size = 0x20000, scoped, tag = 'input window, operand 3, single buffered']
    %13 = vsyncpa [#allocation4], 0
    %14 = vsyncpa [#allocation6], 0
    // Predicated region
    $region2: #{tpu_custom_call.1} parent=1 // pred_check
      _
    $region3: #{tpu_custom_call.1} parent=1 // pred_check_branch
      %16 = sbr.rel (0) target = $region5
    $region4: #{tpu_custom_call.1} parent=1 // pred_region
      %s18 = ssub.s32 128, 128
      %19 = vsyncadd [#allocation4], %s18
      %s21 = sshll.u32 [#allocation3], 4
      %s22 = int_to_ptr.vmem [resolvable:$true] %s21
      %24 = dma.hbm_to_vmem [thread:$0]  %s0, 128, %s22, [#allocation4]
    $region5: #{tpu_custom_call.1} parent=1 // pred_fallthru
      _
    // Predicated region
    $region6: #{tpu_custom_call.1} parent=1 // pred_check
      _
    $region7: #{tpu_custom_call.1} parent=1 // pred_check_branch
      %26 = sbr.rel (0) target = $region9
    $region8: #{tpu_custom_call.1} parent=1 // pred_region
      %s28 = ssub.s32 2048, 2048
      %29 = vsyncadd [#allocation6], %s28
      %s30 = sshll.u32 [#allocation5], 4
      %s31 = int_to_ptr.vmem [resolvable:$true] %s30
      %36 = dma.hbm_to_vmem [thread:$0]  %s1, 2048, %s31, [#allocation6], 128, 128, 8
    $region9: #{tpu_custom_call.1} parent=1 // pred_fallthru
      _
    // Predicated region
    $region10: #{tpu_custom_call.1} parent=1 // pred_check
      _
    $region11: #{tpu_custom_call.1} parent=1 // pred_check_branch
      %38 = sbr.rel (0) target = $region13
    $region12: #{tpu_custom_call.1} parent=1 // pred_region
      _
    $region13: #{tpu_custom_call.1} parent=1 // pred_fallthru
      _
    // Predicated region
    $region14: #{tpu_custom_call.1} parent=1 // pred_check
      _
    $region15: #{tpu_custom_call.1} parent=1 // pred_check_branch
      %40 = sbr.rel (0) target = $region17
    $region16: #{tpu_custom_call.1} parent=1 // pred_region
      %s42 = ssub.s32 4096, 4096
      %43 = vsyncadd [#allocation6], %s42
      %s44 = sshll.u32 [#allocation7], 4
      %s45 = int_to_ptr.vmem [resolvable:$true] %s44
      %50 = dma.hbm_to_vmem [thread:$0]  %s3, 4096, %s45, [#allocation6], 128, 128, 8
    $region17: #{tpu_custom_call.1} parent=1 // pred_fallthru
      _
    // Predicated region
    $region18: #{tpu_custom_call.1} parent=1 // pred_check
      _
    $region19: #{tpu_custom_call.1} parent=1 // pred_check_branch
      %52 = sbr.rel (0) target = $region21
    $region20: #{tpu_custom_call.1} parent=1 // pred_region
      _
    $region21: #{tpu_custom_call.1} parent=1 // pred_fallthru
      _
    // Predicated region
    $region22: #{tpu_custom_call.1} parent=1 // pred_check
      _
    $region23: #{tpu_custom_call.1} parent=1 // pred_check_branch
      %54 = sbr.rel (0) target = $region25
    $region24: #{tpu_custom_call.1} parent=1 // pred_region
      _
    $region25: #{tpu_custom_call.1} parent=1 // pred_fallthru
      _
    // Predicated region
    $region26: #{tpu_custom_call.1} parent=1 // pred_check
      _
    $region27: #{tpu_custom_call.1} parent=1 // pred_check_branch
      %56 = sbr.rel (0) target = $region29
    $region28: #{tpu_custom_call.1} parent=1 // pred_region
      _
    $region29: #{tpu_custom_call.1} parent=1 // pred_fallthru
      _
    // Predicated region
    $region30: #{tpu_custom_call.1} parent=1 // pred_check
      _
    $region31: #{tpu_custom_call.1} parent=1 // pred_check_branch
      %58 = sbr.rel (0) target = $region33
    $region32: #{tpu_custom_call.1} parent=1 // pred_region
      %59 = dma.done [#allocation4], 128
    $region33: #{tpu_custom_call.1} parent=1 // pred_fallthru
      _
    // Predicated region
    $region34: #{tpu_custom_call.1} parent=1 // pred_check
      _
    $region35: #{tpu_custom_call.1} parent=1 // pred_check_branch
      %61 = sbr.rel (0) target = $region37
    $region36: #{tpu_custom_call.1} parent=1 // pred_region
      %62 = dma.done [#allocation6], 2048
    $region37: #{tpu_custom_call.1} parent=1 // pred_fallthru
      _
    // Predicated region
    $region38: #{tpu_custom_call.1} parent=1 // pred_check
      _
    $region39: #{tpu_custom_call.1} parent=1 // pred_check_branch
      %64 = sbr.rel (0) target = $region41
    $region40: #{tpu_custom_call.1} parent=1 // pred_region
      %65 = dma.done [#allocation6], 4096
    $region41: #{tpu_custom_call.1} parent=1 // pred_fallthru
      _
    %v67 = vld [vmem:[#allocation3] sm:$0xff]
    %v68 = vpack.c.bf16 %v67, %v67
    %v69 = vld [vmem:[#allocation5] sm:$0xff]
    %v70 = vld [vmem:[#allocation5 + $0x8] sm:$0xff]
    %v71 = vld [vmem:[#allocation5 + $0x10] sm:$0xff]
    %v72 = vld [vmem:[#allocation5 + $0x18] sm:$0xff]
    %v73 = vld [vmem:[#allocation5 + $0x20] sm:$0xff]
    %v74 = vld [vmem:[#allocation5 + $0x28] sm:$0xff]
    %v75 = vld [vmem:[#allocation5 + $0x30] sm:$0xff]
    %v76 = vld [vmem:[#allocation5 + $0x38] sm:$0xff]
    %v77 = vld [vmem:[#allocation5 + $0x40] sm:$0xff]
    %v78 = vld [vmem:[#allocation5 + $0x48] sm:$0xff]
    %v79 = vld [vmem:[#allocation5 + $0x50] sm:$0xff]
    %v80 = vld [vmem:[#allocation5 + $0x58] sm:$0xff]
    %v81 = vld [vmem:[#allocation5 + $0x60] sm:$0xff]
    %v82 = vld [vmem:[#allocation5 + $0x68] sm:$0xff]
    %v83 = vld [vmem:[#allocation5 + $0x70] sm:$0xff]
    %v84 = vld [vmem:[#allocation5 + $0x78] sm:$0xff]
    %v85 = vld [vmem:[%s2] sm:$0x3]
    %v87 = vlaneseq
    %v88 = vshrl.u32 %v87, 7
    %v89 = vsub.s32 0, %v88
    %v90 = vrot.slane %v85, %v89
    %v91 = vlaneseq
    %v92 = vshrl.u32 %v91, 7
    %v93 = vsub.s32 1, %v92
    %v94 = vrot.slane %v85, %v93
    %v113 = vunpack.c.l.b16 %v69
    %v114 = vunpack.c.h.b16 %v69
    %v115 = vunpack.c.l.b16 %v70
    %v116 = vunpack.c.h.b16 %v70
    %v117 = vunpack.c.l.b16 %v71
    %v118 = vunpack.c.h.b16 %v71
    %v119 = vunpack.c.l.b16 %v72
    %v120 = vunpack.c.h.b16 %v72
    %v121 = vunpack.c.l.b16 %v73
    %v122 = vunpack.c.h.b16 %v73
    %v123 = vunpack.c.l.b16 %v74
    %v124 = vunpack.c.h.b16 %v74
    %v125 = vunpack.c.l.b16 %v75
    %v126 = vunpack.c.h.b16 %v75
    %v127 = vunpack.c.l.b16 %v76
    %v128 = vunpack.c.h.b16 %v76
    %v129 = vunpack.c.l.b16 %v77
    %v130 = vunpack.c.h.b16 %v77
    %v131 = vunpack.c.l.b16 %v78
    %v132 = vunpack.c.h.b16 %v78
    %v133 = vunpack.c.l.b16 %v79
    %v134 = vunpack.c.h.b16 %v79
    %v135 = vunpack.c.l.b16 %v80
    %v136 = vunpack.c.h.b16 %v80
    %v137 = vunpack.c.l.b16 %v81
    %v138 = vunpack.c.h.b16 %v81
    %v139 = vunpack.c.l.b16 %v82
    %v140 = vunpack.c.h.b16 %v82
    %v141 = vunpack.c.l.b16 %v83
    %v142 = vunpack.c.h.b16 %v83
    %v143 = vunpack.c.l.b16 %v84
    %v144 = vunpack.c.h.b16 %v84
    %v145 = vpack.c.b16 %v115, %v113
    %v146 = vpack.c.b16 %v116, %v114
    %v147 = vpack.c.b16 %v119, %v117
    %v148 = vpack.c.b16 %v120, %v118
    %v149 = vpack.c.b16 %v123, %v121
    %v150 = vpack.c.b16 %v124, %v122
    %v151 = vpack.c.b16 %v127, %v125
    %v152 = vpack.c.b16 %v128, %v126
    %v153 = vpack.c.b16 %v131, %v129
    %v154 = vpack.c.b16 %v132, %v130
    %v155 = vpack.c.b16 %v135, %v133
    %v156 = vpack.c.b16 %v136, %v134
    %v157 = vpack.c.b16 %v139, %v137
    %v158 = vpack.c.b16 %v140, %v138
    %v159 = vpack.c.b16 %v143, %v141
    %v160 = vpack.c.b16 %v144, %v142
    %177 = vmatprep.subr.bf16.mxu0 %v160
    %178 = vmatpush1.bf16.msra.mxu0 %v159
    %179 = vmatprep.subr.bf16.mxu0 %v158
    %180 = vmatpush1.bf16.msra.mxu0 %v157
    %181 = vmatprep.subr.bf16.mxu0 %v156
    %182 = vmatpush1.bf16.msra.mxu0 %v155
    %183 = vmatprep.subr.bf16.mxu0 %v154
    %184 = vmatpush1.bf16.msra.mxu0 %v153
    %185 = vmatprep.subr.bf16.mxu0 %v152
    %186 = vmatpush1.bf16.msra.mxu0 %v151
    %187 = vmatprep.subr.bf16.mxu0 %v150
    %188 = vmatpush1.bf16.msra.mxu0 %v149
    %189 = vmatprep.subr.bf16.mxu0 %v148
    %190 = vmatpush1.bf16.msra.mxu0 %v147
    %191 = vmatprep.subr.bf16.mxu0 %v146
    %192 = vmatpush1.bf16.msra.mxu0 %v145
    %193 = vmatprep.subr.bf16.mxu0 0
    %194 = vmatpush2.bf16.msra.mxu0 0
    %195 = vmatprep.subr.bf16.mxu0 0
    %196 = vmatpush2.bf16.msra.mxu0 0
    %197 = vmatprep.subr.bf16.mxu0 0
    %198 = vmatpush2.bf16.msra.mxu0 0
    %199 = vmatprep.subr.bf16.mxu0 0
    %200 = vmatpush2.bf16.msra.mxu0 0
    %201 = vmatprep.subr.bf16.mxu0 0
    %202 = vmatpush2.bf16.msra.mxu0 0
    %203 = vmatprep.subr.bf16.mxu0 0
    %204 = vmatpush2.bf16.msra.mxu0 0
    %205 = vmatprep.subr.bf16.mxu0 0
    %206 = vmatpush2.bf16.msra.mxu0 0
    %207 = vmatprep.subr.bf16.mxu0 0
    %208 = vmatpush2.bf16.msra.mxu0 0
    %209 = vmatprep.mubr.bf16.mxu0 0
    %210 = vmatmul.mubr.bf16.gmra.mxu0 %v68
    %v211 = vpop.f32.mrf.mxu0
    %v212 = vadd.f32 %v90, %v211
    %v213 = vpop.f32.mrf.mxu0
    %v214 = vadd.f32 %v94, %v213
    %v215 = vpop.f32.mrf.mxu0
    %v216 = vpop.f32.mrf.mxu0
    %217 = vdwg.mxu0
    %v218 = vmax.f32 %v212, 0.0
    %v219 = vmax.f32 %v214, 0.0
    %v220 = vpack.c.bf16 %v218, %v218
    %v221 = vpack.c.bf16 %v219, %v219
    %v222 = vld [vmem:[#allocation7] sm:$0xff]
    %v223 = vld [vmem:[#allocation7 + $0x8] sm:$0xff]
    %v224 = vld [vmem:[#allocation7 + $0x10] sm:$0xff]
    %v225 = vld [vmem:[#allocation7 + $0x18] sm:$0xff]
    %v226 = vld [vmem:[#allocation7 + $0x20] sm:$0xff]
    %v227 = vld [vmem:[#allocation7 + $0x28] sm:$0xff]
    %v228 = vld [vmem:[#allocation7 + $0x30] sm:$0xff]
    %v229 = vld [vmem:[#allocation7 + $0x38] sm:$0xff]
    %v230 = vld [vmem:[#allocation7 + $0x40] sm:$0xff]
    %v231 = vld [vmem:[#allocation7 + $0x48] sm:$0xff]
    %v232 = vld [vmem:[#allocation7 + $0x50] sm:$0xff]
    %v233 = vld [vmem:[#allocation7 + $0x58] sm:$0xff]
    %v234 = vld [vmem:[#allocation7 + $0x60] sm:$0xff]
    %v235 = vld [vmem:[#allocation7 + $0x68] sm:$0xff]
    %v236 = vld [vmem:[#allocation7 + $0x70] sm:$0xff]
    %v237 = vld [vmem:[#allocation7 + $0x78] sm:$0xff]
    %v238 = vld [vmem:[#allocation7 + $0x80] sm:$0xff]
    %v239 = vld [vmem:[#allocation7 + $0x88] sm:$0xff]
    %v240 = vld [vmem:[#allocation7 + $0x90] sm:$0xff]
    %v241 = vld [vmem:[#allocation7 + $0x98] sm:$0xff]
    %v242 = vld [vmem:[#allocation7 + $0xa0] sm:$0xff]
    %v243 = vld [vmem:[#allocation7 + $0xa8] sm:$0xff]
    %v244 = vld [vmem:[#allocation7 + $0xb0] sm:$0xff]
    %v245 = vld [vmem:[#allocation7 + $0xb8] sm:$0xff]
    %v246 = vld [vmem:[#allocation7 + $0xc0] sm:$0xff]
    %v247 = vld [vmem:[#allocation7 + $0xc8] sm:$0xff]
    %v248 = vld [vmem:[#allocation7 + $0xd0] sm:$0xff]
    %v249 = vld [vmem:[#allocation7 + $0xd8] sm:$0xff]
    %v250 = vld [vmem:[#allocation7 + $0xe0] sm:$0xff]
    %v251 = vld [vmem:[#allocation7 + $0xe8] sm:$0xff]
    %v252 = vld [vmem:[#allocation7 + $0xf0] sm:$0xff]
    %v253 = vld [vmem:[#allocation7 + $0xf8] sm:$0xff]
    %v254 = vld [vmem:[%s4] sm:$0x3]
    %v256 = vlaneseq
    %v257 = vshrl.u32 %v256, 7
    %v258 = vsub.s32 0, %v257
    %v259 = vrot.slane %v254, %v258
    %v260 = vlaneseq
    %v261 = vshrl.u32 %v260, 7
    %v262 = vsub.s32 1, %v261
    %v263 = vrot.slane %v254, %v262
    %v298 = vunpack.c.l.b16 %v222
    %v299 = vunpack.c.h.b16 %v222
    %v300 = vunpack.c.l.b16 %v223
    %v301 = vunpack.c.h.b16 %v223
    %v302 = vunpack.c.l.b16 %v224
    %v303 = vunpack.c.h.b16 %v224
    %v304 = vunpack.c.l.b16 %v225
    %v305 = vunpack.c.h.b16 %v225
    %v306 = vunpack.c.l.b16 %v226
    %v307 = vunpack.c.h.b16 %v226
    %v308 = vunpack.c.l.b16 %v227
    %v309 = vunpack.c.h.b16 %v227
    %v310 = vunpack.c.l.b16 %v228
    %v311 = vunpack.c.h.b16 %v228
    %v312 = vunpack.c.l.b16 %v229
    %v313 = vunpack.c.h.b16 %v229
    %v314 = vunpack.c.l.b16 %v230
    %v315 = vunpack.c.h.b16 %v230
    %v316 = vunpack.c.l.b16 %v231
    %v317 = vunpack.c.h.b16 %v231
    %v318 = vunpack.c.l.b16 %v232
    %v319 = vunpack.c.h.b16 %v232
    %v320 = vunpack.c.l.b16 %v233
    %v321 = vunpack.c.h.b16 %v233
    %v322 = vunpack.c.l.b16 %v234
    %v323 = vunpack.c.h.b16 %v234
    %v324 = vunpack.c.l.b16 %v235
    %v325 = vunpack.c.h.b16 %v235
    %v326 = vunpack.c.l.b16 %v236
    %v327 = vunpack.c.h.b16 %v236
    %v328 = vunpack.c.l.b16 %v237
    %v329 = vunpack.c.h.b16 %v237
    %v330 = vunpack.c.l.b16 %v238
    %v331 = vunpack.c.h.b16 %v238
    %v332 = vunpack.c.l.b16 %v239
    %v333 = vunpack.c.h.b16 %v239
    %v334 = vunpack.c.l.b16 %v240
    %v335 = vunpack.c.h.b16 %v240
    %v336 = vunpack.c.l.b16 %v241
    %v337 = vunpack.c.h.b16 %v241
    %v338 = vunpack.c.l.b16 %v242
    %v339 = vunpack.c.h.b16 %v242
    %v340 = vunpack.c.l.b16 %v243
    %v341 = vunpack.c.h.b16 %v243
    %v342 = vunpack.c.l.b16 %v244
    %v343 = vunpack.c.h.b16 %v244
    %v344 = vunpack.c.l.b16 %v245
    %v345 = vunpack.c.h.b16 %v245
    %v346 = vunpack.c.l.b16 %v246
    %v347 = vunpack.c.h.b16 %v246
    %v348 = vunpack.c.l.b16 %v247
    %v349 = vunpack.c.h.b16 %v247
    %v350 = vunpack.c.l.b16 %v248
    %v351 = vunpack.c.h.b16 %v248
    %v352 = vunpack.c.l.b16 %v249
    %v353 = vunpack.c.h.b16 %v249
    %v354 = vunpack.c.l.b16 %v250
    %v355 = vunpack.c.h.b16 %v250
    %v356 = vunpack.c.l.b16 %v251
    %v357 = vunpack.c.h.b16 %v251
    %v358 = vunpack.c.l.b16 %v252
    %v359 = vunpack.c.h.b16 %v252
    %v360 = vunpack.c.l.b16 %v253
    %v361 = vunpack.c.h.b16 %v253
    %v362 = vpack.c.b16 %v300, %v298
    %v363 = vpack.c.b16 %v301, %v299
    %v364 = vpack.c.b16 %v304, %v302
    %v365 = vpack.c.b16 %v305, %v303
    %v366 = vpack.c.b16 %v308, %v306
    %v367 = vpack.c.b16 %v309, %v307
    %v368 = vpack.c.b16 %v312, %v310
    %v369 = vpack.c.b16 %v313, %v311
    %v370 = vpack.c.b16 %v316, %v314
    %v371 = vpack.c.b16 %v317, %v315
    %v372 = vpack.c.b16 %v320, %v318
    %v373 = vpack.c.b16 %v321, %v319
    %v374 = vpack.c.b16 %v324, %v322
    %v375 = vpack.c.b16 %v325, %v323
    %v376 = vpack.c.b16 %v328, %v326
    %v377 = vpack.c.b16 %v329, %v327
    %v378 = vpack.c.b16 %v332, %v330
    %v379 = vpack.c.b16 %v333, %v331
    %v380 = vpack.c.b16 %v336, %v334
    %v381 = vpack.c.b16 %v337, %v335
    %v382 = vpack.c.b16 %v340, %v338
    %v383 = vpack.c.b16 %v341, %v339
    %v384 = vpack.c.b16 %v344, %v342
    %v385 = vpack.c.b16 %v345, %v343
    %v386 = vpack.c.b16 %v348, %v346
    %v387 = vpack.c.b16 %v349, %v347
    %v388 = vpack.c.b16 %v352, %v350
    %v389 = vpack.c.b16 %v353, %v351
    %v390 = vpack.c.b16 %v356, %v354
    %v391 = vpack.c.b16 %v357, %v355
    %v392 = vpack.c.b16 %v360, %v358
    %v393 = vpack.c.b16 %v361, %v359
    %426 = vmatprep.subr.bf16.mxu0 %v377
    %427 = vmatpush1.bf16.msra.mxu0 %v376
    %428 = vmatprep.subr.bf16.mxu0 %v375
    %429 = vmatpush1.bf16.msra.mxu0 %v374
    %430 = vmatprep.subr.bf16.mxu0 %v373
    %431 = vmatpush1.bf16.msra.mxu0 %v372
    %432 = vmatprep.subr.bf16.mxu0 %v371
    %433 = vmatpush1.bf16.msra.mxu0 %v370
    %434 = vmatprep.subr.bf16.mxu0 %v369
    %435 = vmatpush1.bf16.msra.mxu0 %v368
    %436 = vmatprep.subr.bf16.mxu0 %v367
    %437 = vmatpush1.bf16.msra.mxu0 %v366
    %438 = vmatprep.subr.bf16.mxu0 %v365
    %439 = vmatpush1.bf16.msra.mxu0 %v364
    %440 = vmatprep.subr.bf16.mxu0 %v363
    %441 = vmatpush1.bf16.msra.mxu0 %v362
    %442 = vmatprep.subr.bf16.mxu0 %v393
    %443 = vmatpush2.bf16.msra.mxu0 %v392
    %444 = vmatprep.subr.bf16.mxu0 %v391
    %445 = vmatpush2.bf16.msra.mxu0 %v390
    %446 = vmatprep.subr.bf16.mxu0 %v389
    %447 = vmatpush2.bf16.msra.mxu0 %v388
    %448 = vmatprep.subr.bf16.mxu0 %v387
    %449 = vmatpush2.bf16.msra.mxu0 %v386
    %450 = vmatprep.subr.bf16.mxu0 %v385
    %451 = vmatpush2.bf16.msra.mxu0 %v384
    %452 = vmatprep.subr.bf16.mxu0 %v383
    %453 = vmatpush2.bf16.msra.mxu0 %v382
    %454 = vmatprep.subr.bf16.mxu0 %v381
    %455 = vmatpush2.bf16.msra.mxu0 %v380
    %456 = vmatprep.subr.bf16.mxu0 %v379
    %457 = vmatpush2.bf16.msra.mxu0 %v378
    %458 = vmatprep.mubr.bf16.mxu0 %v221
    %459 = vmatmul.mubr.bf16.gmra.mxu0 %v220
    %v460 = vpop.f32.mrf.mxu0
    %v461 = vadd.f32 %v259, %v460
    %v462 = vpop.f32.mrf.mxu0
    %v463 = vadd.f32 %v263, %v462
    %v464 = vpop.f32.mrf.mxu0
    %v465 = vpop.f32.mrf.mxu0
    %466 = vdwg.mxu0
    %v467 = vmax.f32 %v461, 0.0
    %v468 = vmax.f32 %v463, 0.0
    %v469 = vld [vmem:[%s5] sm:$0x3]
    %v471 = vlaneseq
    %v472 = vshrl.u32 %v471, 7
    %v473 = vsub.s32 0, %v472
    %v474 = vrot.slane %v469, %v473
    %v475 = vlaneseq
    %v476 = vshrl.u32 %v475, 7
    %v477 = vsub.s32 1, %v476
    %v478 = vrot.slane %v469, %v477
    %v481 = vmul.f32 %v467, %v474
    %v482 = vmul.f32 %v468, %v478
    %v483 = vadd.f32 %v481, %v482
    %484 = vadd.xlane.f32.xlu0 %v483
    %v485 = vpop.xlane.xlu0 %484
    %s486 = sld [smem:[#allocation2]]
    %v487 = vstv %s486
    %v488 = vadd.f32 %v485, %v487
    %vm489 = vcmask 7168
    %490 = vst.msk [vmem:[%s7] sm:$0xff] %vm489, %v488
    // Predicated region
    $region42: #{tpu_custom_call.1} parent=1 // pred_check
      _
    $region43: #{tpu_custom_call.1} parent=1 // pred_check_branch
      %492 = sbr.rel (0) target = $region45
    $region44: #{tpu_custom_call.1} parent=1 // pred_region
      _
    $region45: #{tpu_custom_call.1} parent=1 // pred_fallthru
      _
    // Predicated region
    $region46: #{tpu_custom_call.1} parent=1 // pred_check
      _
    $region47: #{tpu_custom_call.1} parent=1 // pred_check_branch
      %494 = sbr.rel (0) target = $region49
    $region48: #{tpu_custom_call.1} parent=1 // pred_region
      _
    $region49: #{tpu_custom_call.1} parent=1 // pred_fallthru
      _
    %495 = vsyncpa [#allocation4], 1
    %496 = vsyncpa [#allocation6], 1

</llo_original>
